<compile_context>
chip_gen: v6e
topology: v6e:2x2x1
jax: 0.10.0
libtpu: 0.0.40
codegen_flags: <defaults>
</compile_context>

<pallas_src>
import functools

import jax
import jax.numpy as jnp
import numpy as np
from jax.experimental import pallas as pl
from jax.experimental.pallas import tpu as pltpu

_LANE = 128
_SUBLANE = 8
_LOG_STD_MIN = -20.0
_LOG_STD_MAX = 2.0


def _round_up(x, m):
    return (x + m - 1) // m * m


def _cdiv(a, b):
    return (a + b - 1) // b


def _policy_kernel(obs_ref, w1_ref, b1_ref, w2_ref, b2_ref, wh_ref, bh_ref,
                   out_ref, *, latent_dim):
    # Layer 1: relu(obs @ W1 + b1)  (bf16 operands, f32 MXU accumulation)
    h = jnp.dot(obs_ref[...], w1_ref[...], preferred_element_type=jnp.float32)
    h = jnp.maximum(h + b1_ref[...], 0.0)

    # Layer 2: relu(h @ W2 + b2)
    h = jnp.dot(h.astype(jnp.bfloat16), w2_ref[...],
                preferred_element_type=jnp.float32)
    h = jnp.maximum(h + b2_ref[...], 0.0)

    # Fused heads: mu in lanes [0, L), log_std in lanes [L, 2L) of one slab.
    y = jnp.dot(h.astype(jnp.bfloat16), wh_ref[...],
                preferred_element_type=jnp.float32) + bh_ref[...]

    # Clamp only the log_std lanes; keep the store a single unmasked 128-lane vst.
    lane = jax.lax.broadcasted_iota(jnp.int32, y.shape, 1)
    is_log_std = (lane >= latent_dim) & (lane < 2 * latent_dim)
    out_ref[...] = jnp.where(is_log_std,
                             jnp.clip(y, _LOG_STD_MIN, _LOG_STD_MAX), y)


def pack_params(params):
    """One-time weight prep: pad K, fuse heads into adjacent lanes, cast to bf16.

    params: dict with w1 [obs_dim,H], b1 [1,H], w2 [H,H], b2 [1,H],
            wmu [H,L], bmu [1,L], wls [H,L], bls [1,L]
    Returns (packed_arrays_dict, latent_dim).
    """
    obs_dim, H = params["w1"].shape
    L = params["wmu"].shape[1]
    Kp = _round_up(obs_dim, _SUBLANE)
    OUTP = _round_up(2 * L, _LANE)

    w1 = params["w1"]
    if Kp != obs_dim:
        w1 = jnp.pad(w1, ((0, Kp - obs_dim), (0, 0)))

    wh = jnp.zeros((H, OUTP), jnp.float32)
    wh = wh.at[:, :L].set(params["wmu"]).at[:, L:2 * L].set(params["wls"])
    bh = jnp.zeros((1, OUTP), jnp.float32)
    bh = bh.at[:, :L].set(params["bmu"]).at[:, L:2 * L].set(params["bls"])

    packed = dict(
        w1=w1.astype(jnp.bfloat16),
        b1=params["b1"].astype(jnp.float32),
        w2=params["w2"].astype(jnp.bfloat16),
        b2=params["b2"].astype(jnp.float32),
        wh=wh.astype(jnp.bfloat16),
        bh=bh.astype(jnp.float32),
    )
    return packed, L


def latent_policy_forward(obs, packed, *, latent_dim, batch_tile_cap=512):
    """Runs LatentPolicy.forward; returns (mu, log_std) float32 [B, L]."""
    B, obs_dim = obs.shape
    Kp, H = packed["w1"].shape
    OUTP = packed["wh"].shape[1]
    L = latent_dim

    # ---- Pad obs features to the pre-padded weight K.
    if Kp != obs_dim:
        obs = jnp.pad(obs, ((0, 0), (0, Kp - obs_dim)))

    # ---- Batch tile: minimize padding; >=2 grid steps when B allows (v7x 2 TCs).
    n_steps = max(1, _cdiv(B, batch_tile_cap))
    if n_steps == 1 and B >= 2 * _SUBLANE:
        n_steps = 2
    tb = _round_up(_cdiv(B, n_steps), _SUBLANE)
    Bp = _round_up(B, tb)
    if Bp != B:
        obs = jnp.pad(obs, ((0, Bp - B), (0, 0)))
    obs_b = obs.astype(jnp.bfloat16)

    grid = (Bp // tb,)

    def invariant(shape):
        # Grid-invariant tensor (weights / biases): same full block every step.
        return pl.BlockSpec(shape, lambda i: (0, 0))

    # ---- Cost model + VMEM guardrail derived from the tile working set.
    w_bytes = (Kp * H + H * H + H * OUTP) * 2 + (2 * H + OUTP) * 4
    flops = 2 * Bp * (Kp * H + H * H + H * OUTP)
    bytes_accessed = Bp * Kp * 2 + w_bytes + Bp * OUTP * 4
    working = (2 * (tb * Kp * 2 + tb * OUTP * 4)   # double-buffered obs / out tiles
               + 2 * w_bytes                       # double-buffered invariants
               + tb * H * 4 * 2 + tb * OUTP * 4)   # f32 intermediates
    vmem_limit = int(min(64 << 20, max(16 << 20, 4 * working)))

    kernel = functools.partial(_policy_kernel, latent_dim=L)

    out = pl.pallas_call(
        kernel,
        out_shape=jax.ShapeDtypeStruct((Bp, OUTP), jnp.float32),
        grid_spec=pltpu.PrefetchScalarGridSpec(
            num_scalar_prefetch=0,
            grid=grid,
            in_specs=[
                pl.BlockSpec((tb, Kp), lambda i: (i, 0)),   # obs tile
                invariant(packed["w1"].shape),
                invariant(packed["b1"].shape),
                invariant(packed["w2"].shape),
                invariant(packed["b2"].shape),
                invariant(packed["wh"].shape),
                invariant(packed["bh"].shape),
            ],
            out_specs=pl.BlockSpec((tb, OUTP), lambda i: (i, 0)),
        ),
        compiler_params=pltpu.CompilerParams(
            dimension_semantics=("parallel",),
            vmem_limit_bytes=vmem_limit,
        ),
        cost_estimate=pl.CostEstimate(flops=flops, transcendentals=0,
                                      bytes_accessed=bytes_accessed),
    )(obs_b, packed["w1"], packed["b1"], packed["w2"], packed["b2"],
      packed["wh"], packed["bh"])

    mu = out[:B, :L]
    log_std = out[:B, L:2 * L]
    return mu, log_std


def init_params(key, obs_dim, latent_dim, hidden_dim):
    """Deterministic init mimicking nn.Linear (uniform +/- 1/sqrt(fan_in))."""
    def linear(k, fan_in, fan_out):
        kw, kb = jax.random.split(k)
        bound = 1.0 / np.sqrt(fan_in)
        w = jax.random.uniform(kw, (fan_in, fan_out), jnp.float32, -bound, bound)
        b = jax.random.uniform(kb, (1, fan_out), jnp.float32, -bound, bound)
        return w, b

    k1, k2, k3, k4 = jax.random.split(key, 4)
    w1, b1 = linear(k1, obs_dim, hidden_dim)
    w2, b2 = linear(k2, hidden_dim, hidden_dim)
    wmu, bmu = linear(k3, hidden_dim, latent_dim)
    wls, bls = linear(k4, hidden_dim, latent_dim)
    return dict(w1=w1, b1=b1, w2=w2, b2=b2,
                wmu=wmu, bmu=bmu, wls=wls, bls=bls)


def _reference_forward(obs, p):
    """Matches the kernel's bf16-operand / f32-accumulate numerics."""
    bf, f32 = jnp.bfloat16, jnp.float32
    h = jnp.dot(obs.astype(bf), p["w1"].astype(bf),
                preferred_element_type=f32) + p["b1"]
    h = jnp.maximum(h, 0.0)
    h = jnp.dot(h.astype(bf), p["w2"].astype(bf),
                preferred_element_type=f32) + p["b2"]
    h = jnp.maximum(h, 0.0)
    mu = jnp.dot(h.astype(bf), p["wmu"].astype(bf),
                 preferred_element_type=f32) + p["bmu"]
    ls = jnp.dot(h.astype(bf), p["wls"].astype(bf),
                 preferred_element_type=f32) + p["bls"]
    return mu, jnp.clip(ls, -20.0, 2.0)


if __name__ == "__main__":
    key = jax.random.PRNGKey(0)
    k_obs, k_par, k_obs2 = jax.random.split(key, 3)

    B, OBS_DIM, LATENT_DIM, HIDDEN_DIM = 8, 16, 8, 128
    obs = jax.random.normal(k_obs, (B, OBS_DIM), jnp.float32)
    params = init_params(k_par, OBS_DIM, LATENT_DIM, HIDDEN_DIM)

    packed, L = pack_params(params)
    fwd = jax.jit(functools.partial(latent_policy_forward, latent_dim=L))

    mu, log_std = fwd(obs, packed)
    mu, log_std = jax.block_until_ready((mu, log_std))

    mu_ref, log_std_ref = _reference_forward(obs, params)
    np.testing.assert_allclose(np.asarray(mu), np.asarray(mu_ref),
                               rtol=2e-3, atol=2e-3)
    np.testing.assert_allclose(np.asarray(log_std), np.asarray(log_std_ref),
                               rtol=2e-3, atol=2e-3)

    # Second check: multi-step "parallel" grid with padded batch rows.
    B2 = 20
    obs2 = jax.random.normal(k_obs2, (B2, OBS_DIM), jnp.float32)
    mu2, ls2 = jax.block_until_ready(fwd(obs2, packed))
    mu2_ref, ls2_ref = _reference_forward(obs2, params)
    np.testing.assert_allclose(np.asarray(mu2), np.asarray(mu2_ref),
                               rtol=2e-3, atol=2e-3)
    np.testing.assert_allclose(np.asarray(ls2), np.asarray(ls2_ref),
                               rtol=2e-3, atol=2e-3)

    print("KERNEL_OK")
</pallas_src>

<mosaic_0001>
module attributes {stable_mosaic.version = 11 : i64} {
  func.func @_policy_kernel(%arg0: i32, %arg1: memref<8x16xbf16, #tpu.memory_space<vmem>>, %arg2: memref<16x128xbf16, #tpu.memory_space<vmem>>, %arg3: memref<1x128xf32, #tpu.memory_space<vmem>>, %arg4: memref<128x128xbf16, #tpu.memory_space<vmem>>, %arg5: memref<1x128xf32, #tpu.memory_space<vmem>>, %arg6: memref<128x128xbf16, #tpu.memory_space<vmem>>, %arg7: memref<1x128xf32, #tpu.memory_space<vmem>>, %arg8: memref<8x128xf32, #tpu.memory_space<vmem>>) attributes {dimension_semantics = [#tpu.dimension_semantics<parallel>], iteration_bounds = array<i64: 1>, scalar_prefetch = 0 : i64, scratch_operands = 0 : i64, tpu.core_type = #tpu.core_type<tc>, window_params = [{transform_indices = @transform_0, window_bounds = array<i64: 8, 16>}, {pipeline_mode = #tpu.pipeline_mode<synchronous>, transform_indices = @transform_1, window_bounds = array<i64: 16, 128>}, {pipeline_mode = #tpu.pipeline_mode<synchronous>, transform_indices = @transform_2, window_bounds = array<i64: 1, 128>}, {pipeline_mode = #tpu.pipeline_mode<synchronous>, transform_indices = @transform_3, window_bounds = array<i64: 128, 128>}, {pipeline_mode = #tpu.pipeline_mode<synchronous>, transform_indices = @transform_4, window_bounds = array<i64: 1, 128>}, {pipeline_mode = #tpu.pipeline_mode<synchronous>, transform_indices = @transform_5, window_bounds = array<i64: 128, 128>}, {pipeline_mode = #tpu.pipeline_mode<synchronous>, transform_indices = @transform_6, window_bounds = array<i64: 1, 128>}, {transform_indices = @transform_7, window_bounds = array<i64: 8, 128>}]} {
    %c0 = arith.constant 0 : index
    %c0_0 = arith.constant 0 : index
    %0 = vector.load %arg1[%c0, %c0_0] : memref<8x16xbf16, #tpu.memory_space<vmem>>, vector<8x16xbf16>
    %c0_1 = arith.constant 0 : index
    %c0_2 = arith.constant 0 : index
    %1 = vector.load %arg2[%c0_1, %c0_2] : memref<16x128xbf16, #tpu.memory_space<vmem>>, vector<16x128xbf16>
    %cst = arith.constant dense<0.000000e+00> : vector<8x128xf32>
    %2 = tpu.matmul %0, %1, %cst {dimension_numbers = #tpu.dot_dimension_numbers<[1], [0], [0], [1], [0, 0, 1, 1], [], []>} : vector<8x16xbf16>, vector<16x128xbf16>, vector<8x128xf32> -> vector<8x128xf32>
    %c0_3 = arith.constant 0 : index
    %c0_4 = arith.constant 0 : index
    %3 = vector.load %arg3[%c0_3, %c0_4] : memref<1x128xf32, #tpu.memory_space<vmem>>, vector<1x128xf32>
    %4 = vector.broadcast %3 : vector<1x128xf32> to vector<8x128xf32>
    %5 = arith.addf %2, %4 : vector<8x128xf32>
    %cst_5 = arith.constant 0.000000e+00 : f32
    %6 = vector.broadcast %cst_5 : f32 to vector<8x128xf32>
    %7 = arith.maximumf %5, %6 : vector<8x128xf32>
    %8 = arith.truncf %7 : vector<8x128xf32> to vector<8x128xbf16>
    %c0_6 = arith.constant 0 : index
    %c0_7 = arith.constant 0 : index
    %9 = vector.load %arg4[%c0_6, %c0_7] : memref<128x128xbf16, #tpu.memory_space<vmem>>, vector<128x128xbf16>
    %cst_8 = arith.constant dense<0.000000e+00> : vector<8x128xf32>
    %10 = tpu.matmul %8, %9, %cst_8 {dimension_numbers = #tpu.dot_dimension_numbers<[1], [0], [0], [1], [0, 0, 1, 1], [], []>} : vector<8x128xbf16>, vector<128x128xbf16>, vector<8x128xf32> -> vector<8x128xf32>
    %c0_9 = arith.constant 0 : index
    %c0_10 = arith.constant 0 : index
    %11 = vector.load %arg5[%c0_9, %c0_10] : memref<1x128xf32, #tpu.memory_space<vmem>>, vector<1x128xf32>
    %12 = vector.broadcast %11 : vector<1x128xf32> to vector<8x128xf32>
    %13 = arith.addf %10, %12 : vector<8x128xf32>
    %cst_11 = arith.constant 0.000000e+00 : f32
    %14 = vector.broadcast %cst_11 : f32 to vector<8x128xf32>
    %15 = arith.maximumf %13, %14 : vector<8x128xf32>
    %16 = arith.truncf %15 : vector<8x128xf32> to vector<8x128xbf16>
    %c0_12 = arith.constant 0 : index
    %c0_13 = arith.constant 0 : index
    %17 = vector.load %arg6[%c0_12, %c0_13] : memref<128x128xbf16, #tpu.memory_space<vmem>>, vector<128x128xbf16>
    %cst_14 = arith.constant dense<0.000000e+00> : vector<8x128xf32>
    %18 = tpu.matmul %16, %17, %cst_14 {dimension_numbers = #tpu.dot_dimension_numbers<[1], [0], [0], [1], [0, 0, 1, 1], [], []>} : vector<8x128xbf16>, vector<128x128xbf16>, vector<8x128xf32> -> vector<8x128xf32>
    %c0_15 = arith.constant 0 : index
    %c0_16 = arith.constant 0 : index
    %19 = vector.load %arg7[%c0_15, %c0_16] : memref<1x128xf32, #tpu.memory_space<vmem>>, vector<1x128xf32>
    %20 = vector.broadcast %19 : vector<1x128xf32> to vector<8x128xf32>
    %21 = arith.addf %18, %20 : vector<8x128xf32>
    %22 = tpu.iota {dimensions = array<i32: 1>} : vector<8x128xi32>
    %c8_i32 = arith.constant 8 : i32
    %23 = vector.broadcast %c8_i32 : i32 to vector<8x128xi32>
    %24 = arith.cmpi sge, %22, %23 : vector<8x128xi32>
    %c16_i32 = arith.constant 16 : i32
    %25 = vector.broadcast %c16_i32 : i32 to vector<8x128xi32>
    %26 = arith.cmpi slt, %22, %25 : vector<8x128xi32>
    %27 = arith.andi %24, %26 : vector<8x128xi1>
    %cst_17 = arith.constant -2.000000e+01 : f32
    %cst_18 = arith.constant 2.000000e+00 : f32
    %28 = vector.broadcast %cst_17 : f32 to vector<8x128xf32>
    %29 = arith.maximumf %28, %21 : vector<8x128xf32>
    %30 = vector.broadcast %cst_18 : f32 to vector<8x128xf32>
    %31 = arith.minimumf %30, %29 : vector<8x128xf32>
    %32 = arith.select %27, %31, %21 : vector<8x128xi1>, vector<8x128xf32>
    %c0_19 = arith.constant 0 : index
    %c0_20 = arith.constant 0 : index
    %33 = vector.load %arg8[%c0_19, %c0_20] : memref<8x128xf32, #tpu.memory_space<vmem>>, vector<8x128xf32>
    tpu.vector_store %arg8[%c0_19, %c0_20], %32 {strides = array<i32>} : memref<8x128xf32, #tpu.memory_space<vmem>>, vector<8x128xf32>,
    return
  }
  func.func @transform_0(%arg0: i32) -> (i32, i32) {
    %c0_i32 = arith.constant 0 : i32
    %c0_i32_0 = arith.constant 0 : i32
    return %arg0, %c0_i32 : i32, i32
  }
  func.func @transform_1(%arg0: i32) -> (i32, i32) {
    %c0_i32 = arith.constant 0 : i32
    %c0_i32_0 = arith.constant 0 : i32
    %c0_i32_1 = arith.constant 0 : i32
    return %c0_i32, %c0_i32_0 : i32, i32
  }
  func.func @transform_2(%arg0: i32) -> (i32, i32) {
    %c0_i32 = arith.constant 0 : i32
    %c0_i32_0 = arith.constant 0 : i32
    %c0_i32_1 = arith.constant 0 : i32
    return %c0_i32, %c0_i32_0 : i32, i32
  }
  func.func @transform_3(%arg0: i32) -> (i32, i32) {
    %c0_i32 = arith.constant 0 : i32
    %c0_i32_0 = arith.constant 0 : i32
    %c0_i32_1 = arith.constant 0 : i32
    return %c0_i32, %c0_i32_0 : i32, i32
  }
  func.func @transform_4(%arg0: i32) -> (i32, i32) {
    %c0_i32 = arith.constant 0 : i32
    %c0_i32_0 = arith.constant 0 : i32
    %c0_i32_1 = arith.constant 0 : i32
    return %c0_i32, %c0_i32_0 : i32, i32
  }
  func.func @transform_5(%arg0: i32) -> (i32, i32) {
    %c0_i32 = arith.constant 0 : i32
    %c0_i32_0 = arith.constant 0 : i32
    %c0_i32_1 = arith.constant 0 : i32
    return %c0_i32, %c0_i32_0 : i32, i32
  }
  func.func @transform_6(%arg0: i32) -> (i32, i32) {
    %c0_i32 = arith.constant 0 : i32
    %c0_i32_0 = arith.constant 0 : i32
    %c0_i32_1 = arith.constant 0 : i32
    return %c0_i32, %c0_i32_0 : i32, i32
  }
  func.func @transform_7(%arg0: i32) -> (i32, i32) {
    %c0_i32 = arith.constant 0 : i32
    %c0_i32_0 = arith.constant 0 : i32
    return %arg0, %c0_i32 : i32, i32
  }
}

</mosaic_0001>

<llo_original>
// kernel: latent_policy_forward.1
$region0: #{latent_policy_forward.1}
  #allocation0 [shape = 'u32[]', space=smem, size = 0x4, offset = 0x4, fixed_abs, tag = 'smem constant byte address 0x4 - core index']
  #allocation1 [shape = 'u32[144,128]{1,0:T(1,128)}', space=vmem, size = 0x12000, scoped, tag = 'internal scratch']
  %s0 = inlined_call_operand.vmem [shape: bf16[8,16], index: 0, kind: input, shape index: {}]
  %s1 = inlined_call_operand.vmem [shape: bf16[16,128], index: 1, kind: input, shape index: {}]
  %s2 = inlined_call_operand.vmem [shape: f32[1,128], index: 2, kind: input, shape index: {}]
  %s3 = inlined_call_operand.hbm [shape: bf16[128,128], index: 3, kind: input, shape index: {}]
  %s4 = inlined_call_operand.vmem [shape: f32[1,128], index: 4, kind: input, shape index: {}]
  %s5 = inlined_call_operand.hbm [shape: bf16[128,128], index: 5, kind: input, shape index: {}]
  %s6 = inlined_call_operand.vmem [shape: f32[1,128], index: 6, kind: input, shape index: {}]
  %s7 = inlined_call_operand.vmem [shape: f32[8,128], index: 7, kind: output, shape index: {}]
  %s8 = sld [smem:[#allocation0]]
  $region46: #{latent_policy_forward.1} parent=0
    _
  %s10 = ssub.s32 1, %s8
  %s11 = scalar_select 0, %s10, %s8
  $region1: #{latent_policy_forward.1} parent=0
    #allocation2 [shape = 'u8[32768]{0}', space=vmem, size = 0x8000, scoped, tag = 'input window, operand 3, single buffered']
    #allocation3 [shape = 's32[1]{0}', space=sflag, size = 0x4, scoped, tag = 'scoped memory for latent_policy_forward.1']
    #allocation4 [shape = 'u8[32768]{0}', space=vmem, size = 0x8000, scoped, tag = 'input window, operand 5, single buffered']
    #allocation5 [shape = 's32[1]{0}', space=sflag, size = 0x4, scoped, tag = 'scoped memory for latent_policy_forward.1']
    %12 = vsyncpa [#allocation3], 0
    %13 = vsyncpa [#allocation5], 0
    // Predicated region
    $region2: #{latent_policy_forward.1} parent=1 // pred_check
      _
    $region3: #{latent_policy_forward.1} parent=1 // pred_check_branch
      %15 = sbr.rel (0) target = $region5
    $region4: #{latent_policy_forward.1} parent=1 // pred_region
      _
    $region5: #{latent_policy_forward.1} parent=1 // pred_fallthru
      _
    // Predicated region
    $region6: #{latent_policy_forward.1} parent=1 // pred_check
      _
    $region7: #{latent_policy_forward.1} parent=1 // pred_check_branch
      %17 = sbr.rel (0) target = $region9
    $region8: #{latent_policy_forward.1} parent=1 // pred_region
      _
    $region9: #{latent_policy_forward.1} parent=1 // pred_fallthru
      _
    // Predicated region
    $region10: #{latent_policy_forward.1} parent=1 // pred_check
      _
    $region11: #{latent_policy_forward.1} parent=1 // pred_check_branch
      %19 = sbr.rel (0) target = $region13
    $region12: #{latent_policy_forward.1} parent=1 // pred_region
      _
    $region13: #{latent_policy_forward.1} parent=1 // pred_fallthru
      _
    // Predicated region
    $region14: #{latent_policy_forward.1} parent=1 // pred_check
      _
    $region15: #{latent_policy_forward.1} parent=1 // pred_check_branch
      %21 = sbr.rel (0) target = $region17
    $region16: #{latent_policy_forward.1} parent=1 // pred_region
      %s23 = ssub.s32 1024, 1024
      %24 = vsyncadd [#allocation3], %s23
      %s25 = sshll.u32 [#allocation2], 4
      %s26 = int_to_ptr.vmem [resolvable:$true] %s25
      %31 = dma.hbm_to_vmem [thread:$0]  %s3, 1024, %s26, [#allocation3], 64, 64, 4
    $region17: #{latent_policy_forward.1} parent=1 // pred_fallthru
      _
    // Predicated region
    $region18: #{latent_policy_forward.1} parent=1 // pred_check
      _
    $region19: #{latent_policy_forward.1} parent=1 // pred_check_branch
      %33 = sbr.rel (0) target = $region21
    $region20: #{latent_policy_forward.1} parent=1 // pred_region
      _
    $region21: #{latent_policy_forward.1} parent=1 // pred_fallthru
      _
    // Predicated region
    $region22: #{latent_policy_forward.1} parent=1 // pred_check
      _
    $region23: #{latent_policy_forward.1} parent=1 // pred_check_branch
      %35 = sbr.rel (0) target = $region25
    $region24: #{latent_policy_forward.1} parent=1 // pred_region
      %s37 = ssub.s32 1024, 1024
      %38 = vsyncadd [#allocation5], %s37
      %s39 = sshll.u32 [#allocation4], 4
      %s40 = int_to_ptr.vmem [resolvable:$true] %s39
      %45 = dma.hbm_to_vmem [thread:$0]  %s5, 1024, %s40, [#allocation5], 64, 64, 4
    $region25: #{latent_policy_forward.1} parent=1 // pred_fallthru
      _
    // Predicated region
    $region26: #{latent_policy_forward.1} parent=1 // pred_check
      _
    $region27: #{latent_policy_forward.1} parent=1 // pred_check_branch
      %47 = sbr.rel (0) target = $region29
    $region28: #{latent_policy_forward.1} parent=1 // pred_region
      _
    $region29: #{latent_policy_forward.1} parent=1 // pred_fallthru
      _
    // Predicated region
    $region30: #{latent_policy_forward.1} parent=1 // pred_check
      _
    $region31: #{latent_policy_forward.1} parent=1 // pred_check_branch
      %49 = sbr.rel (0) target = $region33
    $region32: #{latent_policy_forward.1} parent=1 // pred_region
      %50 = dma.done [#allocation3], 1024
    $region33: #{latent_policy_forward.1} parent=1 // pred_fallthru
      _
    // Predicated region
    $region34: #{latent_policy_forward.1} parent=1 // pred_check
      _
    $region35: #{latent_policy_forward.1} parent=1 // pred_check_branch
      %52 = sbr.rel (0) target = $region37
    $region36: #{latent_policy_forward.1} parent=1 // pred_region
      %53 = dma.done [#allocation5], 1024
    $region37: #{latent_policy_forward.1} parent=1 // pred_fallthru
      _
    %v55 = vld [vmem:[%s0] sm:$0xf]
    %v56 = vld [vmem:[%s1] sm:$0xf]
    %v57 = vld [vmem:[%s1 + $0x4] sm:$0xf]
    %v58 = vld [vmem:[%s2] sm:$0x1]
    %v60 = vlaneseq
    %v61 = vshrl.u32 %v60, 7
    %v62 = vsub.s32 0, %v61
    %v63 = vrot.slane %v58, %v62
    %v67 = vunpack.c.l.b16 %v56
    %v68 = vunpack.c.l.b16 %v57
    %v69 = vpack.c.b16 %v68, %v67
    %vm71 = vcmask 130048
    %v73 = vsel %vm71, %v55, 0
    %75 = vmatprep.subr.bf16.mxu0 0
    %76 = vmatpush1.bf16.msra.mxu0 0
    %77 = vmatprep.subr.bf16.mxu0 0
    %78 = vmatpush1.bf16.msra.mxu0 0
    %79 = vmatprep.subr.bf16.mxu0 0
    %80 = vmatpush1.bf16.msra.mxu0 0
    %81 = vmatprep.subr.bf16.mxu0 0
    %82 = vmatpush1.bf16.msra.mxu0 0
    %83 = vmatprep.subr.bf16.mxu0 0
    %84 = vmatpush1.bf16.msra.mxu0 0
    %85 = vmatprep.subr.bf16.mxu0 0
    %86 = vmatpush1.bf16.msra.mxu0 0
    %87 = vmatprep.subr.bf16.mxu0 0
    %88 = vmatpush1.bf16.msra.mxu0 0
    %89 = vmatprep.subr.bf16.mxu0 0
    %90 = vmatpush1.bf16.msra.mxu0 %v69
    %91 = vmatprep.subr.bf16.mxu0 0
    %92 = vmatpush2.bf16.msra.mxu0 0
    %93 = vmatprep.subr.bf16.mxu0 0
    %94 = vmatpush2.bf16.msra.mxu0 0
    %95 = vmatprep.subr.bf16.mxu0 0
    %96 = vmatpush2.bf16.msra.mxu0 0
    %97 = vmatprep.subr.bf16.mxu0 0
    %98 = vmatpush2.bf16.msra.mxu0 0
    %99 = vmatprep.subr.bf16.mxu0 0
    %100 = vmatpush2.bf16.msra.mxu0 0
    %101 = vmatprep.subr.bf16.mxu0 0
    %102 = vmatpush2.bf16.msra.mxu0 0
    %103 = vmatprep.subr.bf16.mxu0 0
    %104 = vmatpush2.bf16.msra.mxu0 0
    %105 = vmatprep.subr.bf16.mxu0 0
    %106 = vmatpush2.bf16.msra.mxu0 0
    %107 = vmatprep.mubr.bf16.mxu0 0
    %108 = vmatmul.mubr.bf16.gmra.mxu0 %v73
    %v109 = vpop.f32.mrf.mxu0
    %v110 = vadd.f32 %v63, %v109
    %v111 = vpop.f32.mrf.mxu0
    %v112 = vpop.f32.mrf.mxu0
    %v113 = vpop.f32.mrf.mxu0
    %114 = vdwg.mxu0
    %v115 = vmax.f32 %v110, 0.0
    %v116 = vpack.c.bf16 %v115, %v115
    %v117 = vld [vmem:[#allocation2] sm:$0xf]
    %v118 = vld [vmem:[#allocation2 + $0x4] sm:$0xf]
    %v119 = vld [vmem:[#allocation2 + $0x8] sm:$0xf]
    %v120 = vld [vmem:[#allocation2 + $0xc] sm:$0xf]
    %v121 = vld [vmem:[#allocation2 + $0x10] sm:$0xf]
    %v122 = vld [vmem:[#allocation2 + $0x14] sm:$0xf]
    %v123 = vld [vmem:[#allocation2 + $0x18] sm:$0xf]
    %v124 = vld [vmem:[#allocation2 + $0x1c] sm:$0xf]
    %v125 = vld [vmem:[#allocation2 + $0x20] sm:$0xf]
    %v126 = vld [vmem:[#allocation2 + $0x24] sm:$0xf]
    %v127 = vld [vmem:[#allocation2 + $0x28] sm:$0xf]
    %v128 = vld [vmem:[#allocation2 + $0x2c] sm:$0xf]
    %v129 = vld [vmem:[#allocation2 + $0x30] sm:$0xf]
    %v130 = vld [vmem:[#allocation2 + $0x34] sm:$0xf]
    %v131 = vld [vmem:[#allocation2 + $0x38] sm:$0xf]
    %v132 = vld [vmem:[#allocation2 + $0x3c] sm:$0xf]
    %v133 = vld [vmem:[%s4] sm:$0x1]
    %v135 = vlaneseq
    %v136 = vshrl.u32 %v135, 7
    %v137 = vsub.s32 0, %v136
    %v138 = vrot.slane %v133, %v137
    %v156 = vunpack.c.l.b16 %v117
    %v157 = vunpack.c.l.b16 %v118
    %v158 = vunpack.c.l.b16 %v119
    %v159 = vunpack.c.l.b16 %v120
    %v160 = vunpack.c.l.b16 %v121
    %v161 = vunpack.c.l.b16 %v122
    %v162 = vunpack.c.l.b16 %v123
    %v163 = vunpack.c.l.b16 %v124
    %v164 = vunpack.c.l.b16 %v125
    %v165 = vunpack.c.l.b16 %v126
    %v166 = vunpack.c.l.b16 %v127
    %v167 = vunpack.c.l.b16 %v128
    %v168 = vunpack.c.l.b16 %v129
    %v169 = vunpack.c.l.b16 %v130
    %v170 = vunpack.c.l.b16 %v131
    %v171 = vunpack.c.l.b16 %v132
    %v172 = vpack.c.b16 %v157, %v156
    %v173 = vpack.c.b16 %v159, %v158
    %v174 = vpack.c.b16 %v161, %v160
    %v175 = vpack.c.b16 %v163, %v162
    %v176 = vpack.c.b16 %v165, %v164
    %v177 = vpack.c.b16 %v167, %v166
    %v178 = vpack.c.b16 %v169, %v168
    %v179 = vpack.c.b16 %v171, %v170
    %188 = vmatprep.subr.bf16.mxu0 0
    %189 = vmatpush1.bf16.msra.mxu0 %v179
    %190 = vmatprep.subr.bf16.mxu0 0
    %191 = vmatpush1.bf16.msra.mxu0 %v178
    %192 = vmatprep.subr.bf16.mxu0 0
    %193 = vmatpush1.bf16.msra.mxu0 %v177
    %194 = vmatprep.subr.bf16.mxu0 0
    %195 = vmatpush1.bf16.msra.mxu0 %v176
    %196 = vmatprep.subr.bf16.mxu0 0
    %197 = vmatpush1.bf16.msra.mxu0 %v175
    %198 = vmatprep.subr.bf16.mxu0 0
    %199 = vmatpush1.bf16.msra.mxu0 %v174
    %200 = vmatprep.subr.bf16.mxu0 0
    %201 = vmatpush1.bf16.msra.mxu0 %v173
    %202 = vmatprep.subr.bf16.mxu0 0
    %203 = vmatpush1.bf16.msra.mxu0 %v172
    %204 = vmatprep.subr.bf16.mxu0 0
    %205 = vmatpush2.bf16.msra.mxu0 0
    %206 = vmatprep.subr.bf16.mxu0 0
    %207 = vmatpush2.bf16.msra.mxu0 0
    %208 = vmatprep.subr.bf16.mxu0 0
    %209 = vmatpush2.bf16.msra.mxu0 0
    %210 = vmatprep.subr.bf16.mxu0 0
    %211 = vmatpush2.bf16.msra.mxu0 0
    %212 = vmatprep.subr.bf16.mxu0 0
    %213 = vmatpush2.bf16.msra.mxu0 0
    %214 = vmatprep.subr.bf16.mxu0 0
    %215 = vmatpush2.bf16.msra.mxu0 0
    %216 = vmatprep.subr.bf16.mxu0 0
    %217 = vmatpush2.bf16.msra.mxu0 0
    %218 = vmatprep.subr.bf16.mxu0 0
    %219 = vmatpush2.bf16.msra.mxu0 0
    %220 = vmatprep.mubr.bf16.mxu0 0
    %221 = vmatmul.mubr.bf16.gmra.mxu0 %v116
    %v222 = vpop.f32.mrf.mxu0
    %v223 = vadd.f32 %v138, %v222
    %v224 = vpop.f32.mrf.mxu0
    %v225 = vpop.f32.mrf.mxu0
    %v226 = vpop.f32.mrf.mxu0
    %227 = vdwg.mxu0
    %v228 = vmax.f32 %v223, 0.0
    %v229 = vpack.c.bf16 %v228, %v228
    %v230 = vld [vmem:[#allocation4] sm:$0xf]
    %v231 = vld [vmem:[#allocation4 + $0x4] sm:$0xf]
    %v232 = vld [vmem:[#allocation4 + $0x8] sm:$0xf]
    %v233 = vld [vmem:[#allocation4 + $0xc] sm:$0xf]
    %v234 = vld [vmem:[#allocation4 + $0x10] sm:$0xf]
    %v235 = vld [vmem:[#allocation4 + $0x14] sm:$0xf]
    %v236 = vld [vmem:[#allocation4 + $0x18] sm:$0xf]
    %v237 = vld [vmem:[#allocation4 + $0x1c] sm:$0xf]
    %v238 = vld [vmem:[#allocation4 + $0x20] sm:$0xf]
    %v239 = vld [vmem:[#allocation4 + $0x24] sm:$0xf]
    %v240 = vld [vmem:[#allocation4 + $0x28] sm:$0xf]
    %v241 = vld [vmem:[#allocation4 + $0x2c] sm:$0xf]
    %v242 = vld [vmem:[#allocation4 + $0x30] sm:$0xf]
    %v243 = vld [vmem:[#allocation4 + $0x34] sm:$0xf]
    %v244 = vld [vmem:[#allocation4 + $0x38] sm:$0xf]
    %v245 = vld [vmem:[#allocation4 + $0x3c] sm:$0xf]
    %v246 = vld [vmem:[%s6] sm:$0x1]
    %v248 = vlaneseq
    %v249 = vshrl.u32 %v248, 7
    %v250 = vsub.s32 0, %v249
    %v251 = vrot.slane %v246, %v250
    %v269 = vunpack.c.l.b16 %v230
    %v270 = vunpack.c.l.b16 %v231
    %v271 = vunpack.c.l.b16 %v232
    %v272 = vunpack.c.l.b16 %v233
    %v273 = vunpack.c.l.b16 %v234
    %v274 = vunpack.c.l.b16 %v235
    %v275 = vunpack.c.l.b16 %v236
    %v276 = vunpack.c.l.b16 %v237
    %v277 = vunpack.c.l.b16 %v238
    %v278 = vunpack.c.l.b16 %v239
    %v279 = vunpack.c.l.b16 %v240
    %v280 = vunpack.c.l.b16 %v241
    %v281 = vunpack.c.l.b16 %v242
    %v282 = vunpack.c.l.b16 %v243
    %v283 = vunpack.c.l.b16 %v244
    %v284 = vunpack.c.l.b16 %v245
    %v285 = vpack.c.b16 %v270, %v269
    %v286 = vpack.c.b16 %v272, %v271
    %v287 = vpack.c.b16 %v274, %v273
    %v288 = vpack.c.b16 %v276, %v275
    %v289 = vpack.c.b16 %v278, %v277
    %v290 = vpack.c.b16 %v280, %v279
    %v291 = vpack.c.b16 %v282, %v281
    %v292 = vpack.c.b16 %v284, %v283
    %301 = vmatprep.subr.bf16.mxu0 0
    %302 = vmatpush1.bf16.msra.mxu0 %v292
    %303 = vmatprep.subr.bf16.mxu0 0
    %304 = vmatpush1.bf16.msra.mxu0 %v291
    %305 = vmatprep.subr.bf16.mxu0 0
    %306 = vmatpush1.bf16.msra.mxu0 %v290
    %307 = vmatprep.subr.bf16.mxu0 0
    %308 = vmatpush1.bf16.msra.mxu0 %v289
    %309 = vmatprep.subr.bf16.mxu0 0
    %310 = vmatpush1.bf16.msra.mxu0 %v288
    %311 = vmatprep.subr.bf16.mxu0 0
    %312 = vmatpush1.bf16.msra.mxu0 %v287
    %313 = vmatprep.subr.bf16.mxu0 0
    %314 = vmatpush1.bf16.msra.mxu0 %v286
    %315 = vmatprep.subr.bf16.mxu0 0
    %316 = vmatpush1.bf16.msra.mxu0 %v285
    %317 = vmatprep.subr.bf16.mxu0 0
    %318 = vmatpush2.bf16.msra.mxu0 0
    %319 = vmatprep.subr.bf16.mxu0 0
    %320 = vmatpush2.bf16.msra.mxu0 0
    %321 = vmatprep.subr.bf16.mxu0 0
    %322 = vmatpush2.bf16.msra.mxu0 0
    %323 = vmatprep.subr.bf16.mxu0 0
    %324 = vmatpush2.bf16.msra.mxu0 0
    %325 = vmatprep.subr.bf16.mxu0 0
    %326 = vmatpush2.bf16.msra.mxu0 0
    %327 = vmatprep.subr.bf16.mxu0 0
    %328 = vmatpush2.bf16.msra.mxu0 0
    %329 = vmatprep.subr.bf16.mxu0 0
    %330 = vmatpush2.bf16.msra.mxu0 0
    %331 = vmatprep.subr.bf16.mxu0 0
    %332 = vmatpush2.bf16.msra.mxu0 0
    %333 = vmatprep.mubr.bf16.mxu0 0
    %334 = vmatmul.mubr.bf16.gmra.mxu0 %v229
    %v335 = vpop.f32.mrf.mxu0
    %v336 = vadd.f32 %v251, %v335
    %v337 = vpop.f32.mrf.mxu0
    %v338 = vpop.f32.mrf.mxu0
    %v339 = vpop.f32.mrf.mxu0
    %340 = vdwg.mxu0
    %v341 = vlaneseq
    %v342 = vand.u32 %v341, 127
    %vm343 = vcmp.ge.s32.totalorder %v342, 8
    %vm344 = vcmp.lt.s32.totalorder %v342, 16
    %vm345 = vmand %vm343, %vm344
    %v346 = vmax.f32 %v336, -20.0
    %v347 = vmin.f32 %v346, 2.0
    %v348 = vsel %vm345, %v347, %v336
    %349 = vst [vmem:[%s7] sm:$0xff] %v348
    // Predicated region
    $region38: #{latent_policy_forward.1} parent=1 // pred_check
      _
    $region39: #{latent_policy_forward.1} parent=1 // pred_check_branch
      %351 = sbr.rel (0) target = $region41
    $region40: #{latent_policy_forward.1} parent=1 // pred_region
      _
    $region41: #{latent_policy_forward.1} parent=1 // pred_fallthru
      _
    // Predicated region
    $region42: #{latent_policy_forward.1} parent=1 // pred_check
      _
    $region43: #{latent_policy_forward.1} parent=1 // pred_check_branch
      %353 = sbr.rel (0) target = $region45
    $region44: #{latent_policy_forward.1} parent=1 // pred_region
      _
    $region45: #{latent_policy_forward.1} parent=1 // pred_fallthru
      _
    %354 = vsyncpa [#allocation3], 1
    %355 = vsyncpa [#allocation5], 1

</llo_original>
